<compile_context>
chip_gen: v7x
topology: tpu7x:2x2x1
jax: 0.10.0
libtpu: 0.0.40
codegen_flags: <defaults>
</compile_context>

<pallas_src>
import functools

import jax
import jax.numpy as jnp
from jax.experimental import pallas as pl
from jax.experimental.pallas import tpu as pltpu


def _round_up(x, m):
    return (x + m - 1) // m * m


def _resblock_kernel(xp_ref, xc_ref, xn_ref, w1_ref, b1_ref, w2_ref, b2_ref,
                     *rest, L, Lt, K, P, HALO, has_proj):
    # xp_ref : (1, HALO, C_in)  last HALO rows of the previous L-tile (clamped)
    # xc_ref : (1, Lt,   C_in)  current L-tile
    # xn_ref : (1, HALO, C_in)  first HALO rows of the next L-tile (clamped)
    # w1_ref : (K*C_in,  C_out) dense im2col-stacked conv1 weight
    # w2_ref : (K*C_out, Co_p)  dense im2col-stacked conv2 weight (lane-padded out)
    # w0_ref : (C_in,    Co_p)  1x1 residual projection       (only if has_proj)
    # out_ref: (1, Lt,   Co_p)
    if has_proj:
        w0_ref, b0_ref, out_ref = rest
    else:
        (out_ref,) = rest

    i = pl.program_id(1)
    nL = pl.num_programs(1)
    Lw = Lt + 2 * HALO
    cd = w1_ref.dtype                       # compute dtype for the MXU matmuls

    # ---- assemble haloed window from HALO-row neighbour blocks (8-aligned) --
    xc = xc_ref[0]                                        # (Lt,   C_in) f32
    prev = xp_ref[0]                                      # (HALO, C_in)
    nxt = xn_ref[0]                                       # (HALO, C_in)
    zeros_h = jnp.zeros_like(prev)
    prev = jnp.where(i > 0, prev, zeros_h)                # zero pad at seq start
    nxt = jnp.where(i < nL - 1, nxt, zeros_h)             # zero pad at seq end
    xwin = jnp.concatenate([prev, xc, nxt], axis=0)       # (Lw, C_in)

    def shifted(a, j):
        # row u of result holds a[u + j - P]; wrapped rows are never consumed
        # because HALO >= 2P (invariant kept in the wrapper).
        s = (P - j) % Lw
        return a if s == 0 else pltpu.roll(a, shift=s, axis=0)

    # ---- conv1: single im2col MXU matmul, dense K*C_in contraction ----------
    cols1 = jnp.concatenate([shifted(xwin, j) for j in range(K)], axis=1)
    h1 = jnp.dot(cols1.astype(cd), w1_ref[...],
                 preferred_element_type=jnp.float32) + b1_ref[...]
    h1 = jnp.maximum(h1, 0.0)                             # (Lw, C_out) f32

    # conv2's zero padding: h1 rows outside the true sequence must be zero.
    u = jax.lax.broadcasted_iota(jnp.int32, (Lw, 1), 0)
    g = i * Lt - HALO + u                                 # global row index
    h1 = jnp.where((g >= 0) & (g < L), h1, 0.0)

    # ---- conv2: single im2col MXU matmul over the Lt output rows ------------
    cols2 = jnp.concatenate(
        [shifted(h1, j)[HALO:HALO + Lt, :] for j in range(K)], axis=1)
    h2 = jnp.dot(cols2.astype(cd), w2_ref[...],
                 preferred_element_type=jnp.float32) + b2_ref[...]
    h2 = jnp.maximum(h2, 0.0)                             # (Lt, Co_p) f32

    # ---- fused epilogue: residual + add, one lane-dense store ----------------
    if has_proj:
        res = jnp.dot(xc.astype(cd), w0_ref[...],
                      preferred_element_type=jnp.float32) + b0_ref[...]
    else:
        Co_p = out_ref.shape[2]
        if Co_p == xc.shape[1]:
            res = xc
        else:
            res = jnp.concatenate(
                [xc, jnp.zeros((Lt, Co_p - xc.shape[1]), xc.dtype)], axis=1)
    out_ref[0] = (h2 + res).astype(out_ref.dtype)


def resblock_pallas_nlc(x_nlc, params, *, k, l_tile=1024,
                        compute_dtype=jnp.float32,
                        vmem_budget_bytes=32 * 1024 * 1024):
    """Channels-last entry point: x_nlc is (B, L, C_in) f32 -> (B, L, C_out)."""
    w1, b1, w2, b2, w0, b0 = params       # post weight-norm effective weights
    B, L, C_in = x_nlc.shape
    C_out = w1.shape[0]
    assert k % 2 == 1, "only the odd-k zero-padding path is implemented"
    # TODO(synk): even-k 'keepdims' crop and padding='cyclic' are not implemented.
    P = k // 2
    has_proj = w0 is not None
    if not has_proj:
        assert C_in == C_out, "identity residual requires in_ch == out_ch"

    HALO = max(8, _round_up(2 * P, 8))    # 8-aligned, covers conv1+conv2 reach
    Co_p = _round_up(C_out, 128)          # lane-dense output store

    # --- L-tile sizing: multiple of HALO, fits VMEM budget, nL >= 2 ----------
    Lt = max(HALO, _round_up(min(l_tile, L), HALO))

    def footprint(lt):                    # rough per-step VMEM bytes
        lw = lt + 2 * HALO
        io = 2 * 4 * (lt * C_in + 2 * HALO * C_in + lt * Co_p)   # dbl-buffered
        wts = 2 * 4 * (k * C_in * C_out + k * C_out * Co_p
                       + (C_in * Co_p if has_proj else 0) + 3 * Co_p)
        tmp = 4 * (lw * C_in + lw * k * C_in + 2 * lw * C_out
                   + lt * k * C_out + 3 * lt * Co_p)
        return io + wts + tmp

    while Lt > HALO and footprint(Lt) > vmem_budget_bytes:
        Lt -= HALO
    if -(-L // Lt) == 1 and L > HALO:     # keep both v7x TensorCores busy at B=1
        Lt = max(HALO, _round_up(-(-L // 2), HALO))
    nL = -(-L // Lt)
    L_pad = nL * Lt
    nH = L_pad // HALO                    # number of HALO-sized blocks along L
    R = Lt // HALO                        # HALO-blocks per L-tile

    # only L is padded in HBM; channels keep their true (small) width
    x_pad = jnp.pad(x_nlc, ((0, 0), (0, L_pad - L), (0, 0)))

    def stack_w(w):
        # (C_out, C, K) -> (K*C, C_out): row j*C + c holds w[:, c, j]
        return jnp.transpose(w, (2, 1, 0)).reshape(k * w.shape[1], C_out)

    W1 = stack_w(w1).astype(compute_dtype)                            # (K*Ci, Co)
    W2 = jnp.pad(stack_w(w2),
                 ((0, 0), (0, Co_p - C_out))).astype(compute_dtype)   # (K*Co, Co_p)
    B1 = b1.reshape(1, C_out).astype(jnp.float32)
    B2 = jnp.pad(b2, (0, Co_p - C_out)).reshape(1, Co_p).astype(jnp.float32)

    inputs = [x_pad, x_pad, x_pad, W1, B1, W2, B2]
    in_specs = [
        # halo-sized neighbour blocks (cuts x DMA from ~3x to ~(1+2*HALO/Lt)x)
        pl.BlockSpec((1, HALO, C_in),
                     lambda b, i: (b, jnp.maximum(i * R - 1, 0), 0)),
        pl.BlockSpec((1, Lt, C_in), lambda b, i: (b, i, 0)),
        pl.BlockSpec((1, HALO, C_in),
                     lambda b, i: (b, jnp.minimum((i + 1) * R, nH - 1), 0)),
        # NOTE(v7x): these constant-index weight blocks could additionally use
        # pipeline_mode=pl.Buffered(1) to halve their resident VMEM.
        pl.BlockSpec((k * C_in, C_out), lambda b, i: (0, 0)),
        pl.BlockSpec((1, C_out), lambda b, i: (0, 0)),
        pl.BlockSpec((k * C_out, Co_p), lambda b, i: (0, 0)),
        pl.BlockSpec((1, Co_p), lambda b, i: (0, 0)),
    ]
    if has_proj:
        W0 = jnp.pad(jnp.transpose(w0[:, :, 0], (1, 0)),
                     ((0, 0), (0, Co_p - C_out))).astype(compute_dtype)
        B0 = jnp.pad(b0, (0, Co_p - C_out)).reshape(1, Co_p).astype(jnp.float32)
        inputs += [W0, B0]
        in_specs += [pl.BlockSpec((C_in, Co_p), lambda b, i: (0, 0)),
                     pl.BlockSpec((1, Co_p), lambda b, i: (0, 0))]

    kernel = functools.partial(_resblock_kernel, L=L, Lt=Lt, K=k, P=P,
                               HALO=HALO, has_proj=has_proj)

    flops = 2 * B * L_pad * (k * C_in * C_out + k * C_out * C_out
                             + (C_in * C_out if has_proj else 0))
    bytes_accessed = (4 * (B * (L_pad + 2 * HALO * nL) * C_in + B * L_pad * Co_p)
                      + sum(int(a.size) * a.dtype.itemsize for a in inputs[3:]))

    est = footprint(Lt)
    vmem_limit = None
    if est > 24 * 1024 * 1024:            # raise scoped limit only when needed;
        vmem_limit = int(min(2 * est, 48 * 1024 * 1024))   # stay < v7x 64 MiB

    out_blc = pl.pallas_call(
        kernel,
        out_shape=jax.ShapeDtypeStruct((B, L_pad, Co_p), jnp.float32),
        grid_spec=pltpu.PrefetchScalarGridSpec(
            num_scalar_prefetch=0,
            grid=(B, nL),
            in_specs=in_specs,
            out_specs=pl.BlockSpec((1, Lt, Co_p), lambda b, i: (b, i, 0)),
        ),
        compiler_params=pltpu.CompilerParams(
            dimension_semantics=("parallel", "parallel"),
            vmem_limit_bytes=vmem_limit),
        cost_estimate=pl.CostEstimate(flops=flops, transcendentals=0,
                                      bytes_accessed=int(bytes_accessed)),
    )(*inputs)

    return out_blc[:, :L, :C_out]


def resblock_pallas(x_ncl, params, *, k, **kwargs):
    """PyTorch NCL adapter (layout glue only). Prefer resblock_pallas_nlc
    end-to-end to avoid these wrapper-side HBM transposes."""
    y = resblock_pallas_nlc(jnp.transpose(x_ncl, (0, 2, 1)), params, k=k, **kwargs)
    return jnp.transpose(y, (0, 2, 1))


# ---------------- parameter setup (deterministic, weight-norm resolved) -----
def make_params(key, in_ch, out_ch, k, identity_residual=False):
    ks = jax.random.split(key, 8)

    def wn(v, g):
        # weight_norm over dims (1,2) per output channel: w = g * v / ||v||
        nrm = jnp.sqrt(jnp.sum(v * v, axis=(1, 2), keepdims=True))
        return g[:, None, None] * v / nrm

    v1 = jax.random.normal(ks[0], (out_ch, in_ch, k), jnp.float32) * 0.3
    g1 = jax.random.uniform(ks[1], (out_ch,), jnp.float32, 0.5, 1.5)
    b1 = jax.random.normal(ks[2], (out_ch,), jnp.float32) * 0.1

    v2 = jax.random.normal(ks[3], (out_ch, out_ch, k), jnp.float32) * 0.3
    g2 = jax.random.uniform(ks[4], (out_ch,), jnp.float32, 0.5, 1.5)
    b2 = jax.random.normal(ks[5], (out_ch,), jnp.float32) * 0.1

    if identity_residual:
        assert in_ch == out_ch
        w0, b0 = None, None
    else:
        w0 = jax.random.normal(ks[6], (out_ch, in_ch, 1), jnp.float32) * 0.3
        b0 = jax.random.normal(ks[7], (out_ch,), jnp.float32) * 0.1

    return (wn(v1, g1), b1, wn(v2, g2), b2, w0, b0)


# ---------------- pure-JAX reference (for verification) ---------------------
def resblock_ref(x_ncl, params, *, k):
    w1, b1, w2, b2, w0, b0 = params
    p = k // 2

    def conv1d(x, w, b, pad):
        y = jax.lax.conv_general_dilated(
            x, w, window_strides=(1,), padding=[(pad, pad)],
            dimension_numbers=("NCH", "OIH", "NCH"))
        return y + b[None, :, None]

    h = jax.nn.relu(conv1d(x_ncl, w1, b1, p))
    h = jax.nn.relu(conv1d(h, w2, b2, p))
    res = x_ncl if w0 is None else conv1d(x_ncl, w0, b0, 0)
    return h + res


if __name__ == "__main__":
    key = jax.random.PRNGKey(0)
    kx1, kp1, kx2, kp2 = jax.random.split(key, 4)

    # Case 1: projection residual (in_ch != out_ch), k=3.
    B, C_in, C_out, L, K = 2, 4, 8, 24, 3
    x1 = jax.random.normal(kx1, (B, C_in, L), jnp.float32)
    p1 = make_params(kp1, C_in, C_out, K)
    ref1 = resblock_ref(x1, p1, k=K)

    out_a = jax.block_until_ready(resblock_pallas(x1, p1, k=K))             # auto tiling (2 tiles)
    out_b = jax.block_until_ready(resblock_pallas(x1, p1, k=K, l_tile=8))   # 3 tiles, interior halo
    out_c = jax.block_until_ready(
        resblock_pallas(x1, p1, k=K, compute_dtype=jnp.bfloat16))           # bf16 MXU path

    assert out_a.shape == (B, C_out, L)
    assert jnp.allclose(out_a, ref1, atol=1e-4, rtol=1e-4), (
        f"max err (auto tiles) {jnp.max(jnp.abs(out_a - ref1))}")
    assert jnp.allclose(out_b, ref1, atol=1e-4, rtol=1e-4), (
        f"max err (3 tiles) {jnp.max(jnp.abs(out_b - ref1))}")
    assert jnp.allclose(out_c, ref1, atol=5e-2, rtol=5e-2), (
        f"max err (bf16) {jnp.max(jnp.abs(out_c - ref1))}")

    # Case 2: identity residual (in_ch == out_ch -> 1x1 matmul skipped), k=5.
    C, K2 = 8, 5
    x2 = jax.random.normal(kx2, (B, C, L), jnp.float32)
    p2 = make_params(kp2, C, C, K2, identity_residual=True)
    ref2 = resblock_ref(x2, p2, k=K2)
    out_d = jax.block_until_ready(resblock_pallas(x2, p2, k=K2, l_tile=8))
    assert jnp.allclose(out_d, ref2, atol=1e-4, rtol=1e-4), (
        f"max err (identity) {jnp.max(jnp.abs(out_d - ref2))}")

    print("KERNEL_OK")
</pallas_src>

<mosaic_0001>
module attributes {stable_mosaic.version = 11 : i64} {
  func.func @_resblock_kernel(%arg0: i32, %arg1: i32, %arg2: memref<1x8x4xf32, #tpu.memory_space<vmem>>, %arg3: memref<1x16x4xf32, #tpu.memory_space<vmem>>, %arg4: memref<1x8x4xf32, #tpu.memory_space<vmem>>, %arg5: memref<12x8xf32, #tpu.memory_space<vmem>>, %arg6: memref<1x8xf32, #tpu.memory_space<vmem>>, %arg7: memref<24x128xf32, #tpu.memory_space<vmem>>, %arg8: memref<1x128xf32, #tpu.memory_space<vmem>>, %arg9: memref<4x128xf32, #tpu.memory_space<vmem>>, %arg10: memref<1x128xf32, #tpu.memory_space<vmem>>, %arg11: memref<1x16x128xf32, #tpu.memory_space<vmem>>) attributes {dimension_semantics = [#tpu.dimension_semantics<parallel>, #tpu.dimension_semantics<parallel>], iteration_bounds = array<i64: 2, 2>, scalar_prefetch = 0 : i64, scratch_operands = 0 : i64, tpu.core_type = #tpu.core_type<tc>, window_params = [{transform_indices = @transform_0, window_bounds = array<i64: 1, 8, 4>}, {transform_indices = @transform_1, window_bounds = array<i64: 1, 16, 4>}, {transform_indices = @transform_2, window_bounds = array<i64: 1, 8, 4>}, {pipeline_mode = #tpu.pipeline_mode<synchronous>, transform_indices = @transform_3, window_bounds = array<i64: 12, 8>}, {pipeline_mode = #tpu.pipeline_mode<synchronous>, transform_indices = @transform_4, window_bounds = array<i64: 1, 8>}, {pipeline_mode = #tpu.pipeline_mode<synchronous>, transform_indices = @transform_5, window_bounds = array<i64: 24, 128>}, {pipeline_mode = #tpu.pipeline_mode<synchronous>, transform_indices = @transform_6, window_bounds = array<i64: 1, 128>}, {pipeline_mode = #tpu.pipeline_mode<synchronous>, transform_indices = @transform_7, window_bounds = array<i64: 4, 128>}, {pipeline_mode = #tpu.pipeline_mode<synchronous>, transform_indices = @transform_8, window_bounds = array<i64: 1, 128>}, {transform_indices = @transform_9, window_bounds = array<i64: 1, 16, 128>}]} {
    %c0 = arith.constant 0 : index
    %c0_0 = arith.constant 0 : index
    %c0_1 = arith.constant 0 : index
    %0 = vector.load %arg3[%c0, %c0_0, %c0_1] : memref<1x16x4xf32, #tpu.memory_space<vmem>>, vector<1x16x4xf32>
    %1 = vector.shape_cast %0 : vector<1x16x4xf32> to vector<16x4xf32>
    %c0_2 = arith.constant 0 : index
    %c0_3 = arith.constant 0 : index
    %c0_4 = arith.constant 0 : index
    %2 = vector.load %arg2[%c0_2, %c0_3, %c0_4] : memref<1x8x4xf32, #tpu.memory_space<vmem>>, vector<1x8x4xf32>
    %3 = vector.shape_cast %2 : vector<1x8x4xf32> to vector<8x4xf32>
    %c0_5 = arith.constant 0 : index
    %c0_6 = arith.constant 0 : index
    %c0_7 = arith.constant 0 : index
    %4 = vector.load %arg4[%c0_5, %c0_6, %c0_7] : memref<1x8x4xf32, #tpu.memory_space<vmem>>, vector<1x8x4xf32>
    %5 = vector.shape_cast %4 : vector<1x8x4xf32> to vector<8x4xf32>
    %cst = arith.constant 0.000000e+00 : f32
    %6 = vector.broadcast %cst : f32 to vector<8x4xf32>
    %c0_i32 = arith.constant 0 : i32
    %7 = arith.cmpi sgt, %arg1, %c0_i32 : i32
    %8 = arith.select %7, %3, %6 : vector<8x4xf32>
    %c1_i32 = arith.constant 1 : i32
    %9 = arith.cmpi slt, %arg1, %c1_i32 : i32
    %10 = arith.select %9, %5, %6 : vector<8x4xf32>
    %11 = tpu.concatenate %8, %1, %10 in 0 : vector<8x4xf32>, vector<16x4xf32>, vector<8x4xf32> -> vector<32x4xf32>
    %c1_i32_8 = arith.constant 1 : i32
    %12 = tpu.dynamic_rotate %11 by %c1_i32_8 dim 0 : vector<32x4xf32>, i32 -> vector<32x4xf32>
    %c31_i32 = arith.constant 31 : i32
    %13 = tpu.dynamic_rotate %11 by %c31_i32 dim 0 : vector<32x4xf32>, i32 -> vector<32x4xf32>
    %14 = tpu.concatenate %12, %11, %13 in 1 : vector<32x4xf32>, vector<32x4xf32>, vector<32x4xf32> -> vector<32x12xf32>
    %c0_9 = arith.constant 0 : index
    %c0_10 = arith.constant 0 : index
    %15 = vector.load %arg5[%c0_9, %c0_10] : memref<12x8xf32, #tpu.memory_space<vmem>>, vector<12x8xf32>
    %cst_11 = arith.constant dense<0.000000e+00> : vector<32x8xf32>
    %16 = tpu.matmul %14, %15, %cst_11 {dimension_numbers = #tpu.dot_dimension_numbers<[1], [0], [0], [1], [0, 0, 1, 1], [], []>} : vector<32x12xf32>, vector<12x8xf32>, vector<32x8xf32> -> vector<32x8xf32>
    %c0_12 = arith.constant 0 : index
    %c0_13 = arith.constant 0 : index
    %17 = vector.load %arg6[%c0_12, %c0_13] : memref<1x8xf32, #tpu.memory_space<vmem>>, vector<1x8xf32>
    %18 = vector.broadcast %17 : vector<1x8xf32> to vector<32x8xf32>
    %19 = arith.addf %16, %18 : vector<32x8xf32>
    %cst_14 = arith.constant 0.000000e+00 : f32
    %20 = vector.broadcast %cst_14 : f32 to vector<32x8xf32>
    %21 = arith.maximumf %19, %20 : vector<32x8xf32>
    %22 = tpu.iota {dimensions = array<i32: 0>} : vector<32x1xi32>
    %c16_i32 = arith.constant 16 : i32
    %23 = arith.muli %arg1, %c16_i32 : i32
    %c8_i32 = arith.constant 8 : i32
    %24 = arith.subi %23, %c8_i32 : i32
    %25 = vector.broadcast %24 : i32 to vector<32x1xi32>
    %26 = arith.addi %25, %22 : vector<32x1xi32>
    %c0_i32_15 = arith.constant 0 : i32
    %27 = vector.broadcast %c0_i32_15 : i32 to vector<32x1xi32>
    %28 = arith.cmpi sge, %26, %27 : vector<32x1xi32>
    %c24_i32 = arith.constant 24 : i32
    %29 = vector.broadcast %c24_i32 : i32 to vector<32x1xi32>
    %30 = arith.cmpi slt, %26, %29 : vector<32x1xi32>
    %31 = arith.andi %28, %30 : vector<32x1xi1>
    %cst_16 = arith.constant 0.000000e+00 : f32
    %32 = vector.shape_cast %31 : vector<32x1xi1> to vector<32x1xi1>
    %33 = vector.broadcast %32 : vector<32x1xi1> to vector<32x8xi1>
    %34 = vector.broadcast %cst_16 : f32 to vector<32x8xf32>
    %35 = arith.select %33, %21, %34 : vector<32x8xi1>, vector<32x8xf32>
    %c1_i32_17 = arith.constant 1 : i32
    %36 = tpu.dynamic_rotate %35 by %c1_i32_17 dim 0 : vector<32x8xf32>, i32 -> vector<32x8xf32>
    %37 = vector.extract_strided_slice %36 {offsets = [8, 0], sizes = [16, 8], strides = [1, 1]} : vector<32x8xf32> to vector<16x8xf32>
    %38 = vector.extract_strided_slice %35 {offsets = [8, 0], sizes = [16, 8], strides = [1, 1]} : vector<32x8xf32> to vector<16x8xf32>
    %c31_i32_18 = arith.constant 31 : i32
    %39 = tpu.dynamic_rotate %35 by %c31_i32_18 dim 0 : vector<32x8xf32>, i32 -> vector<32x8xf32>
    %40 = vector.extract_strided_slice %39 {offsets = [8, 0], sizes = [16, 8], strides = [1, 1]} : vector<32x8xf32> to vector<16x8xf32>
    %41 = tpu.concatenate %37, %38, %40 in 1 : vector<16x8xf32>, vector<16x8xf32>, vector<16x8xf32> -> vector<16x24xf32>
    %c0_19 = arith.constant 0 : index
    %c0_20 = arith.constant 0 : index
    %42 = vector.load %arg7[%c0_19, %c0_20] : memref<24x128xf32, #tpu.memory_space<vmem>>, vector<24x128xf32>
    %cst_21 = arith.constant dense<0.000000e+00> : vector<16x128xf32>
    %43 = tpu.matmul %41, %42, %cst_21 {dimension_numbers = #tpu.dot_dimension_numbers<[1], [0], [0], [1], [0, 0, 1, 1], [], []>} : vector<16x24xf32>, vector<24x128xf32>, vector<16x128xf32> -> vector<16x128xf32>
    %c0_22 = arith.constant 0 : index
    %c0_23 = arith.constant 0 : index
    %44 = vector.load %arg8[%c0_22, %c0_23] : memref<1x128xf32, #tpu.memory_space<vmem>>, vector<1x128xf32>
    %45 = vector.broadcast %44 : vector<1x128xf32> to vector<16x128xf32>
    %46 = arith.addf %43, %45 : vector<16x128xf32>
    %cst_24 = arith.constant 0.000000e+00 : f32
    %47 = vector.broadcast %cst_24 : f32 to vector<16x128xf32>
    %48 = arith.maximumf %46, %47 : vector<16x128xf32>
    %c0_25 = arith.constant 0 : index
    %c0_26 = arith.constant 0 : index
    %49 = vector.load %arg9[%c0_25, %c0_26] : memref<4x128xf32, #tpu.memory_space<vmem>>, vector<4x128xf32>
    %cst_27 = arith.constant dense<0.000000e+00> : vector<16x128xf32>
    %50 = tpu.matmul %1, %49, %cst_27 {dimension_numbers = #tpu.dot_dimension_numbers<[1], [0], [0], [1], [0, 0, 1, 1], [], []>} : vector<16x4xf32>, vector<4x128xf32>, vector<16x128xf32> -> vector<16x128xf32>
    %c0_28 = arith.constant 0 : index
    %c0_29 = arith.constant 0 : index
    %51 = vector.load %arg10[%c0_28, %c0_29] : memref<1x128xf32, #tpu.memory_space<vmem>>, vector<1x128xf32>
    %52 = vector.broadcast %51 : vector<1x128xf32> to vector<16x128xf32>
    %53 = arith.addf %50, %52 : vector<16x128xf32>
    %54 = arith.addf %48, %53 : vector<16x128xf32>
    %c0_30 = arith.constant 0 : index
    %c0_31 = arith.constant 0 : index
    %c0_32 = arith.constant 0 : index
    %55 = vector.load %arg11[%c0_30, %c0_31, %c0_32] : memref<1x16x128xf32, #tpu.memory_space<vmem>>, vector<1x16x128xf32>
    %56 = vector.shape_cast %55 : vector<1x16x128xf32> to vector<16x128xf32>
    %57 = vector.shape_cast %54 : vector<16x128xf32> to vector<1x16x128xf32>
    tpu.vector_store %arg11[%c0_30, %c0_31, %c0_32], %57 {strides = array<i32>} : memref<1x16x128xf32, #tpu.memory_space<vmem>>, vector<1x16x128xf32>,
    return
  }
  func.func @transform_0(%arg0: i32, %arg1: i32) -> (i32, i32, i32) {
    %c2_i32 = arith.constant 2 : i32
    %0 = arith.muli %arg1, %c2_i32 : i32
    %c1_i32 = arith.constant 1 : i32
    %1 = arith.subi %0, %c1_i32 : i32
    %c0_i32 = arith.constant 0 : i32
    %2 = arith.maxsi %1, %c0_i32 : i32
    %c0_i32_0 = arith.constant 0 : i32
    %c0_i32_1 = arith.constant 0 : i32
    return %arg0, %2, %c0_i32_0 : i32, i32, i32
  }
  func.func @transform_1(%arg0: i32, %arg1: i32) -> (i32, i32, i32) {
    %c0_i32 = arith.constant 0 : i32
    %c0_i32_0 = arith.constant 0 : i32
    return %arg0, %arg1, %c0_i32 : i32, i32, i32
  }
  func.func @transform_2(%arg0: i32, %arg1: i32) -> (i32, i32, i32) {
    %c1_i32 = arith.constant 1 : i32
    %0 = arith.addi %arg1, %c1_i32 : i32
    %c2_i32 = arith.constant 2 : i32
    %1 = arith.muli %0, %c2_i32 : i32
    %c3_i32 = arith.constant 3 : i32
    %2 = arith.minsi %1, %c3_i32 : i32
    %c0_i32 = arith.constant 0 : i32
    %c0_i32_0 = arith.constant 0 : i32
    return %arg0, %2, %c0_i32 : i32, i32, i32
  }
  func.func @transform_3(%arg0: i32, %arg1: i32) -> (i32, i32) {
    %c0_i32 = arith.constant 0 : i32
    %c0_i32_0 = arith.constant 0 : i32
    %c0_i32_1 = arith.constant 0 : i32
    return %c0_i32, %c0_i32_0 : i32, i32
  }
  func.func @transform_4(%arg0: i32, %arg1: i32) -> (i32, i32) {
    %c0_i32 = arith.constant 0 : i32
    %c0_i32_0 = arith.constant 0 : i32
    %c0_i32_1 = arith.constant 0 : i32
    return %c0_i32, %c0_i32_0 : i32, i32
  }
  func.func @transform_5(%arg0: i32, %arg1: i32) -> (i32, i32) {
    %c0_i32 = arith.constant 0 : i32
    %c0_i32_0 = arith.constant 0 : i32
    %c0_i32_1 = arith.constant 0 : i32
    return %c0_i32, %c0_i32_0 : i32, i32
  }
  func.func @transform_6(%arg0: i32, %arg1: i32) -> (i32, i32) {
    %c0_i32 = arith.constant 0 : i32
    %c0_i32_0 = arith.constant 0 : i32
    %c0_i32_1 = arith.constant 0 : i32
    return %c0_i32, %c0_i32_0 : i32, i32
  }
  func.func @transform_7(%arg0: i32, %arg1: i32) -> (i32, i32) {
    %c0_i32 = arith.constant 0 : i32
    %c0_i32_0 = arith.constant 0 : i32
    %c0_i32_1 = arith.constant 0 : i32
    return %c0_i32, %c0_i32_0 : i32, i32
  }
  func.func @transform_8(%arg0: i32, %arg1: i32) -> (i32, i32) {
    %c0_i32 = arith.constant 0 : i32
    %c0_i32_0 = arith.constant 0 : i32
    %c0_i32_1 = arith.constant 0 : i32
    return %c0_i32, %c0_i32_0 : i32, i32
  }
  func.func @transform_9(%arg0: i32, %arg1: i32) -> (i32, i32, i32) {
    %c0_i32 = arith.constant 0 : i32
    %c0_i32_0 = arith.constant 0 : i32
    return %arg0, %arg1, %c0_i32 : i32, i32, i32
  }
}

</mosaic_0001>

<llo_original>
// kernel: tpu_custom_call.1
$region0: #{tpu_custom_call.1}
  #allocation0 [shape = 'u32[]', space=smem, size = 0x4, offset = 0x4, fixed_abs, tag = 'smem constant byte address 0x4 - core index']
  #allocation1 [shape = 'u32[144,128]{1,0:T(1,128)}', space=vmem, size = 0x12000, scoped, tag = 'internal scratch']
  %s0 = inlined_call_operand.vmem [shape: f32[2,32,4], index: 0, kind: input, shape index: {}]
  %s1 = inlined_call_operand.vmem [shape: f32[2,32,4], index: 1, kind: input, shape index: {}]
  %s2 = inlined_call_operand.vmem [shape: f32[2,32,4], index: 2, kind: input, shape index: {}]
  %s3 = inlined_call_operand.vmem [shape: f32[12,8], index: 3, kind: input, shape index: {}]
  %s4 = inlined_call_operand.vmem [shape: f32[1,8], index: 4, kind: input, shape index: {}]
  %s5 = inlined_call_operand.vmem [shape: f32[24,128], index: 5, kind: input, shape index: {}]
  %s6 = inlined_call_operand.vmem [shape: f32[1,128], index: 6, kind: input, shape index: {}]
  %s7 = inlined_call_operand.vmem [shape: f32[4,128], index: 7, kind: input, shape index: {}]
  %s8 = inlined_call_operand.vmem [shape: f32[1,128], index: 8, kind: input, shape index: {}]
  %s9 = inlined_call_operand.hbm [shape: f32[2,32,128], index: 9, kind: output, shape index: {}]
  %s10 = sld [smem:[#allocation0]]
  $region69: #{tpu_custom_call.1} parent=0
    _
  %s12 = ssub.s32 1, %s10
  %s13 = scalar_select 0, %s12, %s10
  $region1: #{tpu_custom_call.1} parent=0
    #allocation2 [shape = 'u8[16384]{0}', space=vmem, size = 0x4000, scoped, tag = 'output window, operand 0']
    #allocation3 [shape = 's32[2]{0}', space=sflag, size = 0x8, scoped, tag = 'scoped memory for tpu_custom_call.1']
    %14 = vsyncpa [#allocation3], 0
    %s15 = scalar_lea.sflag [#allocation3], 1
    %16 = vsyncpa %s15, 0
    loop: start=0, step=1, limit=6
    $region2: #{tpu_custom_call.1} parent=1 // loop_pre_header
      _
    $region3: #{tpu_custom_call.1} parent=1 // loop_header
      %s18 = sphi 0, %s22
      %p19 = scmp.ge.s32.totalorder %s18, 6
      %s25 = sphi 0, %s37
      %s26 = sphi 0, %s33
      %s27 = sphi 0, %s25
      %s28 = sphi 0, %s26
      %s29 = sphi 0, %s27
      %s30 = sphi 0, %s28
      %s50 = sphi 0, %s52
      %s53 = sphi 0, %s50
      %s54 = sphi 0, %s53
      %s70 = sphi 0, %s54
      %s78 = sphi 0, %s80
      %s81 = sphi 0, %s78
      %s82 = sphi 0, %s81
      %s98 = sphi 0, %s82
      %s114 = sphi 0, %s116
      %s117 = sphi 0, %s114
      %s118 = sphi 0, %s117
      %s134 = sphi 0, %s118
      %s138 = sphi 0, %s138
      %s140 = sphi 0, %s138
      %s141 = sphi 0, %s140
      %s155 = sphi 0, %s141
      %s159 = sphi 0, %s159
      %s161 = sphi 0, %s159
      %s162 = sphi 0, %s161
      %s176 = sphi 0, %s162
      %s180 = sphi 0, %s180
      %s182 = sphi 0, %s180
      %s183 = sphi 0, %s182
      %s197 = sphi 0, %s183
      %s201 = sphi 0, %s201
      %s203 = sphi 0, %s201
      %s204 = sphi 0, %s203
      %s218 = sphi 0, %s204
      %s222 = sphi 0, %s222
      %s224 = sphi 0, %s222
      %s225 = sphi 0, %s224
      %s239 = sphi 0, %s225
      %s243 = sphi 0, %s243
      %s245 = sphi 0, %s243
      %s246 = sphi 0, %s245
      %s260 = sphi 0, %s246
      %s268 = sphi 0, %s270
      %s271 = sphi 0, %s268
      %s272 = sphi 0, %s271
      %s288 = sphi 0, %s272
    $region4: #{tpu_custom_call.1} parent=1 // loop_header_branch
      %21 = sbr.rel (%p19) target = $region8
    $region5: #{tpu_custom_call.1} parent=1 // loop_body
      %s23 = ssub.s32 %s18, 1
      %s24 = ssub.s32 %s18, 2
      %s31 = sadd.s32 1, %s26
      %p32 = scmp.ge.s32.totalorder %s31, 2
      %s33 = scalar_select %p32, 0, %s31
      %s34 = sadd.s32 1, %s25
      %s35 = scalar_select %p32, %s34, %s25
      %p36 = scmp.ge.s32.totalorder %s35, 2
      %s37 = scalar_select %p36, 0, %s35
      %s38 = smul.u32 %s26, 2
      %s39 = ssub.s32 %s38, 1
      %p40 = scmp.gt.s32.totalorder %s39, 0
      %s41 = scalar_select %p40, %s39, 0
      %s42 = smul.u32 %s33, 2
      %s43 = ssub.s32 %s42, 1
      %p44 = scmp.gt.s32.totalorder %s43, 0
      %s45 = scalar_select %p44, %s43, 0
      %s46 = ssub.s32 %s25, %s37
      %s47 = ssub.s32 %s41, %s45
      %s48 = sor.u32 %s46, %s47
      %p49 = scmp.eq.s32.totalorder %s48, 0
      %s51 = sadd.s32 %s50, 1
      %s52 = scalar_select %p49, %s50, %s51
      %p55 = pneg %p49
      %p56 = scmp.eq.s32.totalorder %s18, 3
      %p57 = por %p55, %p56
      %p58 = scmp.ne.s32.totalorder %s50, %s53
      %p59 = scmp.eq.s32.totalorder %s18, 0
      %p60 = por %p58, %p59
      %p61 = scmp.ne.s32.totalorder %s50, %s53
      %p62 = scmp.eq.s32.totalorder %s23, 3
      %p63 = por %p61, %p62
      %p64 = scmp.ne.s32.totalorder %s53, %s54
      %p65 = scmp.eq.s32.totalorder %s23, 0
      %p66 = por %p64, %p65
      %p67 = scmp.ne.s32.totalorder %s53, %s54
      %p68 = scmp.eq.s32.totalorder %s24, 3
      %p69 = por %p67, %p68
      %p71 = scmp.ne.s32.totalorder %s54, %s70
      %p72 = scmp.eq.s32.totalorder %s24, 0
      %p73 = por %p71, %p72
      %s74 = ssub.s32 %s25, %s37
      %s75 = ssub.s32 %s26, %s33
      %s76 = sor.u32 %s74, %s75
      %p77 = scmp.eq.s32.totalorder %s76, 0
      %s79 = sadd.s32 %s78, 1
      %s80 = scalar_select %p77, %s78, %s79
      %p83 = pneg %p77
      %p84 = scmp.eq.s32.totalorder %s18, 3
      %p85 = por %p83, %p84
      %p86 = scmp.ne.s32.totalorder %s78, %s81
      %p87 = scmp.eq.s32.totalorder %s18, 0
      %p88 = por %p86, %p87
      %p89 = scmp.ne.s32.totalorder %s78, %s81
      %p90 = scmp.eq.s32.totalorder %s23, 3
      %p91 = por %p89, %p90
      %p92 = scmp.ne.s32.totalorder %s81, %s82
      %p93 = scmp.eq.s32.totalorder %s23, 0
      %p94 = por %p92, %p93
      %p95 = scmp.ne.s32.totalorder %s81, %s82
      %p96 = scmp.eq.s32.totalorder %s24, 3
      %p97 = por %p95, %p96
      %p99 = scmp.ne.s32.totalorder %s82, %s98
      %p100 = scmp.eq.s32.totalorder %s24, 0
      %p101 = por %p99, %p100
      %s102 = sadd.s32 %s26, 1
      %s103 = smul.u32 %s102, 2
      %p104 = scmp.lt.s32.totalorder %s103, 3
      %s105 = scalar_select %p104, %s103, 3
      %s106 = sadd.s32 %s33, 1
      %s107 = smul.u32 %s106, 2
      %p108 = scmp.lt.s32.totalorder %s107, 3
      %s109 = scalar_select %p108, %s107, 3
      %s110 = ssub.s32 %s25, %s37
      %s111 = ssub.s32 %s105, %s109
      %s112 = sor.u32 %s110, %s111
      %p113 = scmp.eq.s32.totalorder %s112, 0
      %s115 = sadd.s32 %s114, 1
      %s116 = scalar_select %p113, %s114, %s115
      %p119 = pneg %p113
      %p120 = scmp.eq.s32.totalorder %s18, 3
      %p121 = por %p119, %p120
      %p122 = scmp.ne.s32.totalorder %s114, %s117
      %p123 = scmp.eq.s32.totalorder %s18, 0
      %p124 = por %p122, %p123
      %p125 = scmp.ne.s32.totalorder %s114, %s117
      %p126 = scmp.eq.s32.totalorder %s23, 3
      %p127 = por %p125, %p126
      %p128 = scmp.ne.s32.totalorder %s117, %s118
      %p129 = scmp.eq.s32.totalorder %s23, 0
      %p130 = por %p128, %p129
      %p131 = scmp.ne.s32.totalorder %s117, %s118
      %p132 = scmp.eq.s32.totalorder %s24, 3
      %p133 = por %p131, %p132
      %p135 = scmp.ne.s32.totalorder %s118, %s134
      %p136 = scmp.eq.s32.totalorder %s24, 0
      %p137 = por %p135, %p136
      %s139 = sadd.s32 %s138, 1
      %p142 = scmp.eq.s32.totalorder %s18, 3
      %p143 = scmp.ne.s32.totalorder %s138, %s140
      %p144 = scmp.eq.s32.totalorder %s18, 0
      %p145 = por %p143, %p144
      %p146 = scmp.ne.s32.totalorder %s138, %s140
      %p147 = scmp.eq.s32.totalorder %s23, 3
      %p148 = por %p146, %p147
      %p149 = scmp.ne.s32.totalorder %s140, %s141
      %p150 = scmp.eq.s32.totalorder %s23, 0
      %p151 = por %p149, %p150
      %p152 = scmp.ne.s32.totalorder %s140, %s141
      %p153 = scmp.eq.s32.totalorder %s24, 3
      %p154 = por %p152, %p153
      %p156 = scmp.ne.s32.totalorder %s141, %s155
      %p157 = scmp.eq.s32.totalorder %s24, 0
      %p158 = por %p156, %p157
      %s160 = sadd.s32 %s159, 1
      %p163 = scmp.eq.s32.totalorder %s18, 3
      %p164 = scmp.ne.s32.totalorder %s159, %s161
      %p165 = scmp.eq.s32.totalorder %s18, 0
      %p166 = por %p164, %p165
      %p167 = scmp.ne.s32.totalorder %s159, %s161
      %p168 = scmp.eq.s32.totalorder %s23, 3
      %p169 = por %p167, %p168
      %p170 = scmp.ne.s32.totalorder %s161, %s162
      %p171 = scmp.eq.s32.totalorder %s23, 0
      %p172 = por %p170, %p171
      %p173 = scmp.ne.s32.totalorder %s161, %s162
      %p174 = scmp.eq.s32.totalorder %s24, 3
      %p175 = por %p173, %p174
      %p177 = scmp.ne.s32.totalorder %s162, %s176
      %p178 = scmp.eq.s32.totalorder %s24, 0
      %p179 = por %p177, %p178
      %s181 = sadd.s32 %s180, 1
      %p184 = scmp.eq.s32.totalorder %s18, 3
      %p185 = scmp.ne.s32.totalorder %s180, %s182
      %p186 = scmp.eq.s32.totalorder %s18, 0
      %p187 = por %p185, %p186
      %p188 = scmp.ne.s32.totalorder %s180, %s182
      %p189 = scmp.eq.s32.totalorder %s23, 3
      %p190 = por %p188, %p189
      %p191 = scmp.ne.s32.totalorder %s182, %s183
      %p192 = scmp.eq.s32.totalorder %s23, 0
      %p193 = por %p191, %p192
      %p194 = scmp.ne.s32.totalorder %s182, %s183
      %p195 = scmp.eq.s32.totalorder %s24, 3
      %p196 = por %p194, %p195
      %p198 = scmp.ne.s32.totalorder %s183, %s197
      %p199 = scmp.eq.s32.totalorder %s24, 0
      %p200 = por %p198, %p199
      %s202 = sadd.s32 %s201, 1
      %p205 = scmp.eq.s32.totalorder %s18, 3
      %p206 = scmp.ne.s32.totalorder %s201, %s203
      %p207 = scmp.eq.s32.totalorder %s18, 0
      %p208 = por %p206, %p207
      %p209 = scmp.ne.s32.totalorder %s201, %s203
      %p210 = scmp.eq.s32.totalorder %s23, 3
      %p211 = por %p209, %p210
      %p212 = scmp.ne.s32.totalorder %s203, %s204
      %p213 = scmp.eq.s32.totalorder %s23, 0
      %p214 = por %p212, %p213
      %p215 = scmp.ne.s32.totalorder %s203, %s204
      %p216 = scmp.eq.s32.totalorder %s24, 3
      %p217 = por %p215, %p216
      %p219 = scmp.ne.s32.totalorder %s204, %s218
      %p220 = scmp.eq.s32.totalorder %s24, 0
      %p221 = por %p219, %p220
      %s223 = sadd.s32 %s222, 1
      %p226 = scmp.eq.s32.totalorder %s18, 3
      %p227 = scmp.ne.s32.totalorder %s222, %s224
      %p228 = scmp.eq.s32.totalorder %s18, 0
      %p229 = por %p227, %p228
      %p230 = scmp.ne.s32.totalorder %s222, %s224
      %p231 = scmp.eq.s32.totalorder %s23, 3
      %p232 = por %p230, %p231
      %p233 = scmp.ne.s32.totalorder %s224, %s225
      %p234 = scmp.eq.s32.totalorder %s23, 0
      %p235 = por %p233, %p234
      %p236 = scmp.ne.s32.totalorder %s224, %s225
      %p237 = scmp.eq.s32.totalorder %s24, 3
      %p238 = por %p236, %p237
      %p240 = scmp.ne.s32.totalorder %s225, %s239
      %p241 = scmp.eq.s32.totalorder %s24, 0
      %p242 = por %p240, %p241
      %s244 = sadd.s32 %s243, 1
      %p247 = scmp.eq.s32.totalorder %s18, 3
      %p248 = scmp.ne.s32.totalorder %s243, %s245
      %p249 = scmp.eq.s32.totalorder %s18, 0
      %p250 = por %p248, %p249
      %p251 = scmp.ne.s32.totalorder %s243, %s245
      %p252 = scmp.eq.s32.totalorder %s23, 3
      %p253 = por %p251, %p252
      %p254 = scmp.ne.s32.totalorder %s245, %s246
      %p255 = scmp.eq.s32.totalorder %s23, 0
      %p256 = por %p254, %p255
      %p257 = scmp.ne.s32.totalorder %s245, %s246
      %p258 = scmp.eq.s32.totalorder %s24, 3
      %p259 = por %p257, %p258
      %p261 = scmp.ne.s32.totalorder %s246, %s260
      %p262 = scmp.eq.s32.totalorder %s24, 0
      %p263 = por %p261, %p262
      %s264 = ssub.s32 %s25, %s37
      %s265 = ssub.s32 %s26, %s33
      %s266 = sor.u32 %s264, %s265
      %p267 = scmp.eq.s32.totalorder %s266, 0
      %s269 = sadd.s32 %s268, 1
      %s270 = scalar_select %p267, %s268, %s269
      %p273 = pneg %p267
      %p274 = scmp.eq.s32.totalorder %s18, 3
      %p275 = por %p273, %p274
      %p276 = scmp.ne.s32.totalorder %s268, %s271
      %p277 = scmp.eq.s32.totalorder %s18, 0
      %p278 = por %p276, %p277
      %p279 = scmp.ne.s32.totalorder %s268, %s271
      %p280 = scmp.eq.s32.totalorder %s23, 3
      %p281 = por %p279, %p280
      %p282 = scmp.ne.s32.totalorder %s271, %s272
      %p283 = scmp.eq.s32.totalorder %s23, 0
      %p284 = por %p282, %p283
      %p285 = scmp.ne.s32.totalorder %s271, %s272
      %p286 = scmp.eq.s32.totalorder %s24, 3
      %p287 = por %p285, %p286
      %p289 = scmp.ne.s32.totalorder %s272, %s288
      %p290 = scmp.eq.s32.totalorder %s24, 0
      %p291 = por %p289, %p290
      %p292 = scmp.le.s32.totalorder 1, %s18
      %p293 = scmp.lt.s32.totalorder %s18, 5
      %p294 = pnand %p292, %p293
      %p295 = pneg %p294
      // Predicated region
      $region9: #{tpu_custom_call.1} parent=5 // pred_check
        _
      $region10: #{tpu_custom_call.1} parent=5 // pred_check_branch
        %297 = sbr.rel (%p294) target = $region12
      $region11: #{tpu_custom_call.1} parent=5 // pred_region
        %s298 = ssub.s32 %s18, 1
        // Predicated region
        $region13: #{tpu_custom_call.1} parent=11 // pred_check
          %p299 = pneg %p151
        $region14: #{tpu_custom_call.1} parent=11 // pred_check_branch
          %301 = sbr.rel (%p299) target = $region16
        $region15: #{tpu_custom_call.1} parent=11 // pred_region
          _
        $region16: #{tpu_custom_call.1} parent=11 // pred_fallthru
          _
        // Predicated region
        $region17: #{tpu_custom_call.1} parent=11 // pred_check
          %p302 = pneg %p172
        $region18: #{tpu_custom_call.1} parent=11 // pred_check_branch
          %304 = sbr.rel (%p302) target = $region20
        $region19: #{tpu_custom_call.1} parent=11 // pred_region
          _
        $region20: #{tpu_custom_call.1} parent=11 // pred_fallthru
          _
        // Predicated region
        $region21: #{tpu_custom_call.1} parent=11 // pred_check
          %p305 = pneg %p193
        $region22: #{tpu_custom_call.1} parent=11 // pred_check_branch
          %307 = sbr.rel (%p305) target = $region24
        $region23: #{tpu_custom_call.1} parent=11 // pred_region
          _
        $region24: #{tpu_custom_call.1} parent=11 // pred_fallthru
          _
        // Predicated region
        $region25: #{tpu_custom_call.1} parent=11 // pred_check
          %p308 = pneg %p214
        $region26: #{tpu_custom_call.1} parent=11 // pred_check_branch
          %310 = sbr.rel (%p308) target = $region28
        $region27: #{tpu_custom_call.1} parent=11 // pred_region
          _
        $region28: #{tpu_custom_call.1} parent=11 // pred_fallthru
          _
        // Predicated region
        $region29: #{tpu_custom_call.1} parent=11 // pred_check
          %p311 = pneg %p235
        $region30: #{tpu_custom_call.1} parent=11 // pred_check_branch
          %313 = sbr.rel (%p311) target = $region32
        $region31: #{tpu_custom_call.1} parent=11 // pred_region
          _
        $region32: #{tpu_custom_call.1} parent=11 // pred_fallthru
          _
        // Predicated region
        $region33: #{tpu_custom_call.1} parent=11 // pred_check
          %p314 = pneg %p256
        $region34: #{tpu_custom_call.1} parent=11 // pred_check_branch
          %316 = sbr.rel (%p314) target = $region36
        $region35: #{tpu_custom_call.1} parent=11 // pred_region
          _
        $region36: #{tpu_custom_call.1} parent=11 // pred_fallthru
          _
      $region12: #{tpu_custom_call.1} parent=5 // pred_fallthru
        _
      %p317 = scmp.lt.s32.totalorder %s18, 4
      // Predicated region
      $region37: #{tpu_custom_call.1} parent=5 // pred_check
        %p318 = pneg %p317
      $region38: #{tpu_custom_call.1} parent=5 // pred_check_branch
        %320 = sbr.rel (%p318) target = $region40
      $region39: #{tpu_custom_call.1} parent=5 // pred_region
        // Predicated region
        $region41: #{tpu_custom_call.1} parent=39 // pred_check
          %p321 = pneg %p60
        $region42: #{tpu_custom_call.1} parent=39 // pred_check_branch
          %323 = sbr.rel (%p321) target = $region44
        $region43: #{tpu_custom_call.1} parent=39 // pred_region
          %s324 = smul.u32 %s26, 2
          %s325 = ssub.s32 %s324, 1
          %p326 = scmp.gt.s32.totalorder %s325, 0
          %s327 = scalar_select %p326, %s325, 0
          %p328 = scmp.lt.s32.totalorder %s25, 1
          %s329 = scalar_select %p328, %s25, 1
          %p330 = scmp.lt.s32.totalorder %s327, 3
          %s331 = scalar_select %p330, %s327, 3
          %s332 = smul.addr %s329, 4
          %s333 = sadd.s32 %s331, %s332
          %s334 = smul.addr %s333, 8
          %s335 = scalar_lea.vmem %s0, %s334
          %s336 = smul.u32 %s26, 2
          %s337 = ssub.s32 %s336, 1
          %p338 = scmp.gt.s32.totalorder %s337, 0
          %s339 = scalar_select %p338, %s337, 0
        $region44: #{tpu_custom_call.1} parent=39 // pred_fallthru
          _
        // Predicated region
        $region45: #{tpu_custom_call.1} parent=39 // pred_check
          %p340 = pneg %p88
        $region46: #{tpu_custom_call.1} parent=39 // pred_check_branch
          %342 = sbr.rel (%p340) target = $region48
        $region47: #{tpu_custom_call.1} parent=39 // pred_region
          %s343 = smul.u32 2, %s26
          %p344 = scmp.lt.s32.totalorder %s25, 1
          %s345 = scalar_select %p344, %s25, 1
          %p346 = scmp.lt.s32.totalorder %s343, 3
          %s347 = scalar_select %p346, %s343, 3
          %s348 = smul.addr %s345, 4
          %s349 = sadd.s32 %s347, %s348
          %s350 = smul.addr %s349, 8
          %s351 = scalar_lea.vmem %s1, %s350
          %s352 = smul.u32 2, %s26
        $region48: #{tpu_custom_call.1} parent=39 // pred_fallthru
          _
        // Predicated region
        $region49: #{tpu_custom_call.1} parent=39 // pred_check
          %p353 = pneg %p124
        $region50: #{tpu_custom_call.1} parent=39 // pred_check_branch
          %355 = sbr.rel (%p353) target = $region52
        $region51: #{tpu_custom_call.1} parent=39 // pred_region
          %s356 = sadd.s32 %s26, 1
          %s357 = smul.u32 %s356, 2
          %p358 = scmp.lt.s32.totalorder %s357, 3
          %s359 = scalar_select %p358, %s357, 3
          %p360 = scmp.lt.s32.totalorder %s25, 1
          %s361 = scalar_select %p360, %s25, 1
          %p362 = scmp.lt.s32.totalorder %s359, 3
          %s363 = scalar_select %p362, %s359, 3
          %s364 = smul.addr %s361, 4
          %s365 = sadd.s32 %s363, %s364
          %s366 = smul.addr %s365, 8
          %s367 = scalar_lea.vmem %s2, %s366
          %s368 = sadd.s32 %s26, 1
          %s369 = smul.u32 %s368, 2
          %p370 = scmp.lt.s32.totalorder %s369, 3
          %s371 = scalar_select %p370, %s369, 3
        $region52: #{tpu_custom_call.1} parent=39 // pred_fallthru
          _
      $region40: #{tpu_custom_call.1} parent=5 // pred_fallthru
        _
      %p372 = scmp.le.s32.totalorder 1, %s18
      %p373 = scmp.lt.s32.totalorder %s18, 5
      %p374 = pnand %p372, %p373
      %p375 = pneg %p374
      // Predicated region
      $region53: #{tpu_custom_call.1} parent=5 // pred_check
        _
      $region54: #{tpu_custom_call.1} parent=5 // pred_check_branch
        %377 = sbr.rel (%p374) target = $region56
      $region55: #{tpu_custom_call.1} parent=5 // pred_region
        %s378 = ssub.s32 %s18, 1
        %s379 = smul.u32 %s28, 2
        %s380 = ssub.s32 %s379, 1
        %p381 = scmp.gt.s32.totalorder %s380, 0
        %s382 = scalar_select %p381, %s380, 0
        %p383 = scmp.lt.s32.totalorder %s27, 1
        %s384 = scalar_select %p383, %s27, 1
        %p385 = scmp.lt.s32.totalorder %s382, 3
        %s386 = scalar_select %p385, %s382, 3
        %s387 = smul.addr %s384, 4
        %s388 = sadd.s32 %s386, %s387
        %s389 = smul.addr %s388, 8
        %s390 = scalar_lea.vmem %s0, %s389
        %p391 = pneg %p66
        %p392 = pneg %p63
        %s393 = smul.u32 2, %s28
        %p394 = scmp.lt.s32.totalorder %s27, 1
        %s395 = scalar_select %p394, %s27, 1
        %p396 = scmp.lt.s32.totalorder %s393, 3
        %s397 = scalar_select %p396, %s393, 3
        %s398 = smul.addr %s395, 4
        %s399 = sadd.s32 %s397, %s398
        %s400 = smul.addr %s399, 8
        %s401 = scalar_lea.vmem %s1, %s400
        %p402 = pneg %p94
        %p403 = pneg %p91
        %s404 = sadd.s32 %s28, 1
        %s405 = smul.u32 %s404, 2
        %p406 = scmp.lt.s32.totalorder %s405, 3
        %s407 = scalar_select %p406, %s405, 3
        %p408 = scmp.lt.s32.totalorder %s27, 1
        %s409 = scalar_select %p408, %s27, 1
        %p410 = scmp.lt.s32.totalorder %s407, 3
        %s411 = scalar_select %p410, %s407, 3
        %s412 = smul.addr %s409, 4
        %s413 = sadd.s32 %s411, %s412
        %s414 = smul.addr %s413, 8
        %s415 = scalar_lea.vmem %s2, %s414
        %p416 = pneg %p130
        %p417 = pneg %p127
        %p418 = pneg %p151
        %p419 = pneg %p148
        %p420 = pneg %p172
        %p421 = pneg %p169
        %p422 = pneg %p193
        %p423 = pneg %p190
        %p424 = pneg %p214
        %p425 = pneg %p211
        %p426 = pneg %p235
        %p427 = pneg %p232
        %p428 = pneg %p256
        %p429 = pneg %p253
        %p430 = pneg %p284
        %p431 = pneg %p281
        %s432 = sand.u32 %s271, 1
        %s433 = scalar_lea.sflag [#allocation3], %s432
        %s434 = sand.u32 %s271, 1
        %s435 = smul.addr %s434, 16
        %s436 = scalar_lea.vmem [#allocation2], %s435
        %s437 = smul.u32 %s28, 2
        %s438 = ssub.s32 %s437, 1
        %p439 = scmp.gt.s32.totalorder %s438, 0
        %s440 = scalar_select %p439, %s438, 0
        %p441 = scmp.lt.s32.totalorder %s27, 1
        %s442 = scalar_select %p441, %s27, 1
        %p443 = scmp.lt.s32.totalorder %s440, 3
        %s444 = scalar_select %p443, %s440, 3
        %s445 = smul.addr %s442, 4
        %s446 = sadd.s32 %s444, %s445
        %s447 = smul.addr %s446, 8
        %s448 = scalar_lea.vmem %s0, %s447
        %s449 = smul.u32 %s28, 2
        %s450 = ssub.s32 %s449, 1
        %p451 = scmp.gt.s32.totalorder %s450, 0
        %s452 = scalar_select %p451, %s450, 0
        %s453 = smul.u32 2, %s28
        %p454 = scmp.lt.s32.totalorder %s27, 1
        %s455 = scalar_select %p454, %s27, 1
        %p456 = scmp.lt.s32.totalorder %s453, 3
        %s457 = scalar_select %p456, %s453, 3
        %s458 = smul.addr %s455, 4
        %s459 = sadd.s32 %s457, %s458
        %s460 = smul.addr %s459, 8
        %s461 = scalar_lea.vmem %s1, %s460
        %s462 = smul.u32 2, %s28
        %s463 = sadd.s32 %s28, 1
        %s464 = smul.u32 %s463, 2
        %p465 = scmp.lt.s32.totalorder %s464, 3
        %s466 = scalar_select %p465, %s464, 3
        %p467 = scmp.lt.s32.totalorder %s27, 1
        %s468 = scalar_select %p467, %s27, 1
        %p469 = scmp.lt.s32.totalorder %s466, 3
        %s470 = scalar_select %p469, %s466, 3
        %s471 = smul.addr %s468, 4
        %s472 = sadd.s32 %s470, %s471
        %s473 = smul.addr %s472, 8
        %s474 = scalar_lea.vmem %s2, %s473
        %s475 = sadd.s32 %s28, 1
        %s476 = smul.u32 %s475, 2
        %p477 = scmp.lt.s32.totalorder %s476, 3
        %s478 = scalar_select %p477, %s476, 3
        %s479 = smul.u32 2, %s28
        %v480 = vld [vmem:[%s461] sm:$0xff]
        %v481 = vld [vmem:[%s461 + $0x8] sm:$0xff]
        %v482 = vld [vmem:[%s448] sm:$0xff]
        %v483 = vld [vmem:[%s474] sm:$0xff]
        %p484 = scmp.gt.s32.totalorder %s28, 0
        %s485 = scalar_select %p484, 1, 0
        %v486 = vstv %s485
        %vm487 = vcmp.eq.s32.totalorder %v486, 1
        %v488 = vsel %vm487, %v482, 0.0
        %p489 = scmp.lt.s32.totalorder %s28, 1
        %s490 = scalar_select %p489, 1, 0
        %v491 = vstv %s490
        %vm492 = vcmp.eq.s32.totalorder %v491, 1
        %v493 = vsel %vm492, %v483, 0.0
        %v494 = vrot.slane %v488, 7
        %v495 = vrot.slane %v480, 7
        %v496 = vrot.slane %v481, 7
        %v497 = vrot.slane %v493, 7
        %v498 = vlaneseq
        %v499 = vshrl.u32 %v498, 7
        %vm500 = vcmp.lt.s32.totalorder %v499, 1
        %v501 = vsel %vm500, %v496, %v497
        %v502 = vsel %vm500, %v495, %v496
        %v503 = vsel %vm500, %v494, %v495
        %v504 = vsel %vm500, %v497, %v494
        %v505 = vrot.slane %v488, 1
        %v506 = vrot.slane %v480, 1
        %v507 = vrot.slane %v481, 1
        %v508 = vrot.slane %v493, 1
        %vm509 = vcmp.lt.s32.totalorder %v499, 7
        %v510 = vsel %vm509, %v507, %v508
        %v511 = vsel %vm509, %v506, %v507
        %v512 = vsel %vm509, %v505, %v506
        %v513 = vsel %vm509, %v508, %v505
        %518 = vrot.lane.b32.xlu0 %v488, 4
        %v519 = vpop.permute.xlu0 %518
        %520 = vrot.lane.b32.xlu0 %v480, 4
        %v521 = vpop.permute.xlu0 %520
        %522 = vrot.lane.b32.xlu0 %v481, 4
        %v523 = vpop.permute.xlu0 %522
        %524 = vrot.lane.b32.xlu0 %v493, 4
        %v525 = vpop.permute.xlu0 %524
        %534 = vrot.lane.b32.xlu0 %v512, 8
        %v535 = vpop.permute.xlu0 %534
        %536 = vrot.lane.b32.xlu0 %v511, 8
        %v537 = vpop.permute.xlu0 %536
        %538 = vrot.lane.b32.xlu0 %v510, 8
        %v539 = vpop.permute.xlu0 %538
        %540 = vrot.lane.b32.xlu0 %v513, 8
        %v541 = vpop.permute.xlu0 %540
        %vm546 = vcmask 31744
        %v547 = vsel %vm546, %v504, %v519
        %v548 = vsel %vm546, %v503, %v521
        %v549 = vsel %vm546, %v502, %v523
        %v550 = vsel %vm546, %v501, %v525
        %vm551 = vcmask 64512
        %v552 = vsel %vm551, %v547, %v535
        %v553 = vsel %vm551, %v548, %v537
        %v554 = vsel %vm551, %v549, %v539
        %v555 = vsel %vm551, %v550, %v541
        %v556 = vld [vmem:[%s3] sm:$0xff]
        %v557 = vld [vmem:[%s3 + $0x8] sm:$0xf]
        %v558 = vld [vmem:[%s4] sm:$0x1]
        %v560 = vlaneseq
        %v561 = vshrl.u32 %v560, 7
        %v562 = vsub.s32 0, %v561
        %v563 = vrot.slane %v558, %v562
        %vm565 = vcmask 97280
        %v567 = vsel %vm565, %v552, 0
        %v570 = vsel %vm565, %v553, 0
        %v573 = vsel %vm565, %v554, 0
        %v576 = vsel %vm565, %v555, 0
        %vm578 = vcmask 1043456
        %v580 = vsel %vm578, %v557, 0
        %582 = vmatprep.subr.mxu0 0.0
        %583 = vmatpush1.msra.mxu0 %v556
        %584 = vmatprep.subr.mxu0 0.0
        %585 = vmatpush1.msra.mxu0 %v580
        %586 = vmatprep.subr.mxu0 0.0
        %587 = vmatpush1.msra.mxu0 0.0
        %588 = vmatprep.subr.mxu0 0.0
        %589 = vmatpush1.msra.mxu0 0.0
        %590 = vmatprep.subr.mxu0 0.0
        %591 = vmatpush1.msra.mxu0 0.0
        %592 = vmatprep.subr.mxu0 0.0
        %593 = vmatpush1.msra.mxu0 0.0
        %594 = vmatprep.subr.mxu0 0.0
        %595 = vmatpush1.msra.mxu0 0.0
        %596 = vmatprep.subr.mxu0 0.0
        %597 = vmatpush1.msra.mxu0 0.0
        %598 = vmatprep.subr.mxu0 0.0
        %599 = vmatpush1.msra.mxu0 0.0
        %600 = vmatprep.subr.mxu0 0.0
        %601 = vmatpush1.msra.mxu0 0.0
        %602 = vmatprep.subr.mxu0 0.0
        %603 = vmatpush1.msra.mxu0 0.0
        %604 = vmatprep.subr.mxu0 0.0
        %605 = vmatpush1.msra.mxu0 0.0
        %606 = vmatprep.subr.mxu0 0.0
        %607 = vmatpush1.msra.mxu0 0.0
        %608 = vmatprep.subr.mxu0 0.0
        %609 = vmatpush1.msra.mxu0 0.0
        %610 = vmatprep.subr.mxu0 0.0
        %611 = vmatpush1.msra.mxu0 0.0
        %612 = vmatprep.subr.mxu0 0.0
        %613 = vmatpush1.msra.mxu0 0.0
        %614 = vmatprep.subr.mxu0 0.0
        %615 = vmatpush1.msra.mxu0 0.0
        %616 = vmatprep.subr.mxu0 0.0
        %617 = vmatpush1.msra.mxu0 0.0
        %618 = vmatprep.subr.mxu0 0.0
        %619 = vmatpush1.msra.mxu0 0.0
        %620 = vmatprep.subr.mxu0 0.0
        %621 = vmatpush1.msra.mxu0 0.0
        %622 = vmatprep.subr.mxu0 0.0
        %623 = vmatpush1.msra.mxu0 0.0
        %624 = vmatprep.subr.mxu0 0.0
        %625 = vmatpush1.msra.mxu0 0.0
        %626 = vmatprep.subr.mxu0 0.0
        %627 = vmatpush1.msra.mxu0 0.0
        %628 = vmatprep.subr.mxu0 0.0
        %629 = vmatpush1.msra.mxu0 0.0
        %630 = vmatprep.subr.mxu0 0.0
        %631 = vmatpush1.msra.mxu0 0.0
        %632 = vmatprep.subr.mxu0 0.0
        %633 = vmatpush1.msra.mxu0 0.0
        %634 = vmatprep.subr.mxu0 0.0
        %635 = vmatpush1.msra.mxu0 0.0
        %636 = vmatprep.subr.mxu0 0.0
        %637 = vmatpush1.msra.mxu0 0.0
        %638 = vmatprep.subr.mxu0 0.0
        %639 = vmatpush1.msra.mxu0 0.0
        %640 = vmatprep.subr.mxu0 0.0
        %641 = vmatpush1.msra.mxu0 0.0
        %642 = vmatprep.subr.mxu0 0.0
        %643 = vmatpush1.msra.mxu0 0.0
        %644 = vmatprep.subr.mxu0 0.0
        %645 = vmatpush1.msra.mxu0 0.0
        %646 = vmatprep.mubr.f32.mxu0 0.0
        %647 = vmatmul.mubr.f32.gmra.mrb[0].mxu0 %v567
        %v648 = vpop.f32.mrb[0].mxu0
        %v649 = vadd.f32 %v563, %v648
        %v650 = vpop.f32.mrb[0].mxu0
        %651 = vmatprep.mubr.f32.mxu0 0.0
        %652 = vmatmul.mubr.f32.gmra.mrb[0].mxu0 %v570
        %v653 = vpop.f32.mrb[0].mxu0
        %v654 = vadd.f32 %v563, %v653
        %v655 = vpop.f32.mrb[0].mxu0
        %656 = vmatprep.mubr.f32.mxu0 0.0
        %657 = vmatmul.mubr.f32.gmra.mrb[0].mxu0 %v573
        %v658 = vpop.f32.mrb[0].mxu0
        %v659 = vadd.f32 %v563, %v658
        %v660 = vpop.f32.mrb[0].mxu0
        %661 = vmatprep.mubr.f32.mxu0 0.0
        %662 = vmatmul.mubr.f32.gmra.mrb[0].mxu0 %v576
        %v663 = vpop.f32.mrb[0].mxu0
        %v664 = vadd.f32 %v563, %v663
        %v665 = vpop.f32.mrb[0].mxu0
        %666 = vdwg.mxu0
        %v667 = vmax.f32 %v649, 0.0
        %v668 = vmax.f32 %v654, 0.0
        %v669 = vmax.f32 %v659, 0.0
        %v670 = vmax.f32 %v664, 0.0
        %v671 = vadd.s32 %v499, 8
        %v672 = vadd.s32 %v499, 16
        %v673 = vadd.s32 %v499, 24
        %s674 = smul.u32 %s28, 16
        %s675 = ssub.s32 %s674, 8
        %v676 = vstv %s675
        %v677 = vadd.s32 %v676, %v499
        %v678 = vadd.s32 %v676, %v671
        %v679 = vadd.s32 %v676, %v672
        %v680 = vadd.s32 %v676, %v673
        %vm681 = vcmp.ge.s32.totalorder %v677, 0
        %vm682 = vcmp.ge.s32.totalorder %v678, 0
        %vm683 = vcmp.ge.s32.totalorder %v679, 0
        %vm684 = vcmp.ge.s32.totalorder %v680, 0
        %vm685 = vcmp.lt.s32.totalorder %v677, 24
        %vm686 = vcmp.lt.s32.totalorder %v678, 24
        %vm687 = vcmp.lt.s32.totalorder %v679, 24
        %vm688 = vcmp.lt.s32.totalorder %v680, 24
        %vm689 = vmand %vm681, %vm685
        %vm690 = vmand %vm682, %vm686
        %vm691 = vmand %vm683, %vm687
        %vm692 = vmand %vm684, %vm688
        %v693 = vsel %vm689, 1, 0
        %v694 = vsel %vm690, 1, 0
        %v695 = vsel %vm691, 1, 0
        %v696 = vsel %vm692, 1, 0
        %vm697 = vcmp.eq.s32.totalorder %v693, 1
        %vm698 = vcmp.eq.s32.totalorder %v694, 1
        %vm699 = vcmp.eq.s32.totalorder %v695, 1
        %vm700 = vcmp.eq.s32.totalorder %v696, 1
        %v701 = vsel %vm697, %v667, 0.0
        %v702 = vsel %vm698, %v668, 0.0
        %v703 = vsel %vm699, %v669, 0.0
        %v704 = vsel %vm700, %v670, 0.0
        %v705 = vrot.slane %v701, 7
        %v706 = vrot.slane %v702, 7
        %v707 = vrot.slane %v703, 7
        %v708 = vsel %vm500, %v706, %v707
        %v709 = vsel %vm500, %v705, %v706
        %v710 = vrot.slane %v702, 1
        %v711 = vrot.slane %v703, 1
        %v712 = vrot.slane %v704, 1
        %v713 = vsel %vm509, %v711, %v712
        %v714 = vsel %vm509, %v710, %v711
        %717 = vrot.lane.b32.xlu0 %v702, 8
        %v718 = vpop.permute.xlu0 %717
        %719 = vrot.lane.b32.xlu0 %v703, 8
        %v720 = vpop.permute.xlu0 %719
        %725 = vrot.lane.b32.xlu0 %v714, 16
        %v726 = vpop.permute.xlu0 %725
        %727 = vrot.lane.b32.xlu0 %v713, 16
        %v728 = vpop.permute.xlu0 %727
        %v731 = vsel %vm551, %v709, %v718
        %v732 = vsel %vm551, %v708, %v720
        %vm733 = vcmask 130048
        %v734 = vsel %vm733, %v731, %v726
        %v735 = vsel %vm733, %v732, %v728
        %v736 = vld [vmem:[%s5] sm:$0xff]
        %v737 = vld [vmem:[%s5 + $0x8] sm:$0xff]
        %v738 = vld [vmem:[%s5 + $0x10] sm:$0xff]
        %v739 = vld [vmem:[%s6] sm:$0x1]
        %v741 = vlaneseq
        %v742 = vshrl.u32 %v741, 7
        %v743 = vsub.s32 0, %v742
        %v744 = vrot.slane %v739, %v743
        %vm746 = vcmask 195584
        %v748 = vsel %vm746, %v734, 0
        %v751 = vsel %vm746, %v735, 0
        %753 = vmatprep.subr.mxu0 0.0
        %754 = vmatpush1.msra.mxu0 %v736
        %755 = vmatprep.subr.mxu0 0.0
        %756 = vmatpush1.msra.mxu0 %v737
        %757 = vmatprep.subr.mxu0 0.0
        %758 = vmatpush1.msra.mxu0 %v738
        %759 = vmatprep.subr.mxu0 0.0
        %760 = vmatpush1.msra.mxu0 0.0
        %761 = vmatprep.subr.mxu0 0.0
        %762 = vmatpush1.msra.mxu0 0.0
        %763 = vmatprep.subr.mxu0 0.0
        %764 = vmatpush1.msra.mxu0 0.0
        %765 = vmatprep.subr.mxu0 0.0
        %766 = vmatpush1.msra.mxu0 0.0
        %767 = vmatprep.subr.mxu0 0.0
        %768 = vmatpush1.msra.mxu0 0.0
        %769 = vmatprep.subr.mxu0 0.0
        %770 = vmatpush1.msra.mxu0 0.0
        %771 = vmatprep.subr.mxu0 0.0
        %772 = vmatpush1.msra.mxu0 0.0
        %773 = vmatprep.subr.mxu0 0.0
        %774 = vmatpush1.msra.mxu0 0.0
        %775 = vmatprep.subr.mxu0 0.0
        %776 = vmatpush1.msra.mxu0 0.0
        %777 = vmatprep.subr.mxu0 0.0
        %778 = vmatpush1.msra.mxu0 0.0
        %779 = vmatprep.subr.mxu0 0.0
        %780 = vmatpush1.msra.mxu0 0.0
        %781 = vmatprep.subr.mxu0 0.0
        %782 = vmatpush1.msra.mxu0 0.0
        %783 = vmatprep.subr.mxu0 0.0
        %784 = vmatpush1.msra.mxu0 0.0
        %785 = vmatprep.subr.mxu0 0.0
        %786 = vmatpush1.msra.mxu0 0.0
        %787 = vmatprep.subr.mxu0 0.0
        %788 = vmatpush1.msra.mxu0 0.0
        %789 = vmatprep.subr.mxu0 0.0
        %790 = vmatpush1.msra.mxu0 0.0
        %791 = vmatprep.subr.mxu0 0.0
        %792 = vmatpush1.msra.mxu0 0.0
        %793 = vmatprep.subr.mxu0 0.0
        %794 = vmatpush1.msra.mxu0 0.0
        %795 = vmatprep.subr.mxu0 0.0
        %796 = vmatpush1.msra.mxu0 0.0
        %797 = vmatprep.subr.mxu0 0.0
        %798 = vmatpush1.msra.mxu0 0.0
        %799 = vmatprep.subr.mxu0 0.0
        %800 = vmatpush1.msra.mxu0 0.0
        %801 = vmatprep.subr.mxu0 0.0
        %802 = vmatpush1.msra.mxu0 0.0
        %803 = vmatprep.subr.mxu0 0.0
        %804 = vmatpush1.msra.mxu0 0.0
        %805 = vmatprep.subr.mxu0 0.0
        %806 = vmatpush1.msra.mxu0 0.0
        %807 = vmatprep.subr.mxu0 0.0
        %808 = vmatpush1.msra.mxu0 0.0
        %809 = vmatprep.subr.mxu0 0.0
        %810 = vmatpush1.msra.mxu0 0.0
        %811 = vmatprep.subr.mxu0 0.0
        %812 = vmatpush1.msra.mxu0 0.0
        %813 = vmatprep.subr.mxu0 0.0
        %814 = vmatpush1.msra.mxu0 0.0
        %815 = vmatprep.subr.mxu0 0.0
        %816 = vmatpush1.msra.mxu0 0.0
        %817 = vmatprep.mubr.f32.mxu0 0.0
        %818 = vmatmul.mubr.f32.gmra.mrb[0].mxu0 %v748
        %v819 = vpop.f32.mrb[0].mxu0
        %v820 = vadd.f32 %v744, %v819
        %v821 = vpop.f32.mrb[0].mxu0
        %822 = vmatprep.mubr.f32.mxu0 0.0
        %823 = vmatmul.mubr.f32.gmra.mrb[0].mxu0 %v751
        %v824 = vpop.f32.mrb[0].mxu0
        %v825 = vadd.f32 %v744, %v824
        %v826 = vpop.f32.mrb[0].mxu0
        %827 = vdwg.mxu0
        %v828 = vmax.f32 %v820, 0.0
        %v829 = vmax.f32 %v825, 0.0
        %v830 = vld [vmem:[%s7] sm:$0xf]
        %v831 = vld [vmem:[%s8] sm:$0x1]
        %v833 = vlaneseq
        %v834 = vshrl.u32 %v833, 7
        %v835 = vsub.s32 0, %v834
        %v836 = vrot.slane %v831, %v835
        %v838 = vsel %vm546, %v480, 0
        %v840 = vsel %vm546, %v481, 0
        %v843 = vsel %vm578, %v830, 0
        %845 = vmatprep.subr.mxu0 0.0
        %846 = vmatpush1.msra.mxu0 %v843
        %847 = vmatprep.subr.mxu0 0.0
        %848 = vmatpush1.msra.mxu0 0.0
        %849 = vmatprep.subr.mxu0 0.0
        %850 = vmatpush1.msra.mxu0 0.0
        %851 = vmatprep.subr.mxu0 0.0
        %852 = vmatpush1.msra.mxu0 0.0
        %853 = vmatprep.subr.mxu0 0.0
        %854 = vmatpush1.msra.mxu0 0.0
        %855 = vmatprep.subr.mxu0 0.0
        %856 = vmatpush1.msra.mxu0 0.0
        %857 = vmatprep.subr.mxu0 0.0
        %858 = vmatpush1.msra.mxu0 0.0
        %859 = vmatprep.subr.mxu0 0.0
        %860 = vmatpush1.msra.mxu0 0.0
        %861 = vmatprep.subr.mxu0 0.0
        %862 = vmatpush1.msra.mxu0 0.0
        %863 = vmatprep.subr.mxu0 0.0
        %864 = vmatpush1.msra.mxu0 0.0
        %865 = vmatprep.subr.mxu0 0.0
        %866 = vmatpush1.msra.mxu0 0.0
        %867 = vmatprep.subr.mxu0 0.0
        %868 = vmatpush1.msra.mxu0 0.0
        %869 = vmatprep.subr.mxu0 0.0
        %870 = vmatpush1.msra.mxu0 0.0
        %871 = vmatprep.subr.mxu0 0.0
        %872 = vmatpush1.msra.mxu0 0.0
        %873 = vmatprep.subr.mxu0 0.0
        %874 = vmatpush1.msra.mxu0 0.0
        %875 = vmatprep.subr.mxu0 0.0
        %876 = vmatpush1.msra.mxu0 0.0
        %877 = vmatprep.subr.mxu0 0.0
        %878 = vmatpush1.msra.mxu0 0.0
        %879 = vmatprep.subr.mxu0 0.0
        %880 = vmatpush1.msra.mxu0 0.0
        %881 = vmatprep.subr.mxu0 0.0
        %882 = vmatpush1.msra.mxu0 0.0
        %883 = vmatprep.subr.mxu0 0.0
        %884 = vmatpush1.msra.mxu0 0.0
        %885 = vmatprep.subr.mxu0 0.0
        %886 = vmatpush1.msra.mxu0 0.0
        %887 = vmatprep.subr.mxu0 0.0
        %888 = vmatpush1.msra.mxu0 0.0
        %889 = vmatprep.subr.mxu0 0.0
        %890 = vmatpush1.msra.mxu0 0.0
        %891 = vmatprep.subr.mxu0 0.0
        %892 = vmatpush1.msra.mxu0 0.0
        %893 = vmatprep.subr.mxu0 0.0
        %894 = vmatpush1.msra.mxu0 0.0
        %895 = vmatprep.subr.mxu0 0.0
        %896 = vmatpush1.msra.mxu0 0.0
        %897 = vmatprep.subr.mxu0 0.0
        %898 = vmatpush1.msra.mxu0 0.0
        %899 = vmatprep.subr.mxu0 0.0
        %900 = vmatpush1.msra.mxu0 0.0
        %901 = vmatprep.subr.mxu0 0.0
        %902 = vmatpush1.msra.mxu0 0.0
        %903 = vmatprep.subr.mxu0 0.0
        %904 = vmatpush1.msra.mxu0 0.0
        %905 = vmatprep.subr.mxu0 0.0
        %906 = vmatpush1.msra.mxu0 0.0
        %907 = vmatprep.subr.mxu0 0.0
        %908 = vmatpush1.msra.mxu0 0.0
        %909 = vmatprep.mubr.f32.mxu0 0.0
        %910 = vmatmul.mubr.f32.gmra.mrb[0].mxu0 %v838
        %v911 = vpop.f32.mrb[0].mxu0
        %v912 = vadd.f32 %v836, %v911
        %v913 = vpop.f32.mrb[0].mxu0
        %914 = vmatprep.mubr.f32.mxu0 0.0
        %915 = vmatmul.mubr.f32.gmra.mrb[0].mxu0 %v840
        %v916 = vpop.f32.mrb[0].mxu0
        %v917 = vadd.f32 %v836, %v916
        %v918 = vpop.f32.mrb[0].mxu0
        %919 = vdwg.mxu0
        %v920 = vadd.f32 %v828, %v912
        %v921 = vadd.f32 %v829, %v917
        %922 = vst [vmem:[%s436] sm:$0xff] %v920
        %923 = vst [vmem:[%s436 + $0x8] sm:$0xff] %v921
        %s924 = sand.u32 %s271, 1
        %s925 = scalar_lea.sflag [#allocation3], %s924
        %s926 = sand.u32 %s271, 1
        %s927 = smul.addr %s926, 16
        %s928 = scalar_lea.vmem [#allocation2], %s927
        // Predicated region
        $region57: #{tpu_custom_call.1} parent=55 // pred_check
          %p929 = pneg %p281
        $region58: #{tpu_custom_call.1} parent=55 // pred_check_branch
          %931 = sbr.rel (%p929) target = $region60
        $region59: #{tpu_custom_call.1} parent=55 // pred_region
          %s932 = smul.u32 2, %s28
          %s934 = ssub.s32 256, 256
          %935 = vsyncadd %s925, %s934
          %s936 = smul.addr %s27, 4
          %s937 = sadd.s32 %s932, %s936
          %s938 = smul.addr %s937, 128
          %s939 = scalar_lea.hbm %s9, %s938
          %s940 = sshll.u32 %s928, 4
          %s941 = int_to_ptr.vmem [resolvable:$true] %s940
          %946 = dma.vmem_to_hbm [thread:$0]  %s941, 256, %s939, %s925, 128, 128, 8
        $region60: #{tpu_custom_call.1} parent=55 // pred_fallthru
          _
      $region56: #{tpu_custom_call.1} parent=5 // pred_fallthru
        _
      %p947 = scmp.le.s32.totalorder 2, %s18
      // Predicated region
      $region61: #{tpu_custom_call.1} parent=5 // pred_check
        %p948 = pneg %p947
      $region62: #{tpu_custom_call.1} parent=5 // pred_check_branch
        %950 = sbr.rel (%p948) target = $region64
      $region63: #{tpu_custom_call.1} parent=5 // pred_region
        %s951 = ssub.s32 %s18, 2
        // Predicated region
        $region65: #{tpu_custom_call.1} parent=63 // pred_check
          %p952 = pneg %p287
        $region66: #{tpu_custom_call.1} parent=63 // pred_check_branch
          %954 = sbr.rel (%p952) target = $region68
        $region67: #{tpu_custom_call.1} parent=63 // pred_region
          %s955 = sand.u32 %s272, 1
          %s956 = scalar_lea.sflag [#allocation3], %s955
          %s957 = sand.u32 %s272, 1
          %s958 = smul.addr %s957, 16
          %s959 = scalar_lea.vmem [#allocation2], %s958
          %960 = dma.done %s956, 256
        $region68: #{tpu_custom_call.1} parent=63 // pred_fallthru
          _
      $region64: #{tpu_custom_call.1} parent=5 // pred_fallthru
        _
    $region6: #{tpu_custom_call.1} parent=1 // loop_footer
      %s22 = sadd.s32 1, %s18
    $region7: #{tpu_custom_call.1} parent=1 // loop_footer_branch
      %17 = sbr.rel target = $region3
    $region8: #{tpu_custom_call.1} parent=1 // loop_exit
      _
    %961 = vsyncpa [#allocation3], 1
    %s962 = scalar_lea.sflag [#allocation3], 1
    %963 = vsyncpa %s962, 1

</llo_original>
